<compile_context>
chip_gen: v5e
topology: v5e:2x2
jax: 0.10.0
libtpu: 0.0.40
codegen_flags: <defaults>
</compile_context>

<pallas_src>
import functools

import jax
import jax.numpy as jnp
from jax.experimental import pallas as pl
from jax.experimental.pallas import tpu as pltpu


# ----------------------------------------------------------------------------
# Kernel 1: silu(temb) @ W^T + b, then fold gamma/beta/shift/scale into A/Bias.
# Whole arrays live in VMEM (M = B is tiny, so no grid — grid steps would only
# add overhead).
# ----------------------------------------------------------------------------
def temb_linear_kernel(t_ref, w_ref, bias_ref, gamma_ref, beta_ref,
                       a_ref, mb_ref, gate_ref, *, embedding_dim):
    E = embedding_dim
    t = t_ref[...].astype(jnp.float32)                        # [B, C]
    silu = t * jax.nn.sigmoid(t)                              # SiLU (VPU/EUP)
    # silu @ W^T done natively on the MXU (contract last dims of both); the
    # weight stays [3E, C] so no transpose is materialized anywhere.
    lin = jax.lax.dot_general(
        silu, w_ref[...].astype(jnp.float32),
        dimension_numbers=(((1,), (1,)), ((), ())),
        preferred_element_type=jnp.float32)                   # [B, 3E]
    lin = lin + bias_ref[...]                                 # + b

    shift = lin[:, 0 * E:1 * E]                               # [B, E]
    scale = lin[:, 1 * E:2 * E]                               # [B, E]
    gate = lin[:, 2 * E:3 * E]                                # [B, E]

    one_plus_scale = 1.0 + scale
    # Fold LayerNorm affine (gamma/beta) and modulation into one FMA's worth
    # of per-element work for the LN kernel:
    #   (xn*gamma + beta)*(1+scale) + shift == xn*A + Bias
    a_ref[...] = (gamma_ref[...] * one_plus_scale).astype(a_ref.dtype)
    mb_ref[...] = (beta_ref[...] * one_plus_scale + shift).astype(mb_ref.dtype)
    gate_ref[...] = gate[:, None, :].astype(gate_ref.dtype)   # [B, 1, E]


# ----------------------------------------------------------------------------
# Kernel 2: LayerNorm over last dim + fused affine modulation: y = xn*A + Bias.
# ----------------------------------------------------------------------------
def ln_mod_kernel(x_ref, a_ref, b_ref, out_ref, *, eps):
    x = x_ref[...].astype(jnp.float32)                        # [1, tS, E]
    mean = jnp.mean(x, axis=-1, keepdims=True)
    var = jnp.mean(jnp.square(x - mean), axis=-1, keepdims=True)
    xn = (x - mean) * jax.lax.rsqrt(var + eps)
    a = a_ref[...][:, None, :]                                # [1, 1, E]
    b = b_ref[...][:, None, :]                                # [1, 1, E]
    out_ref[...] = (xn * a + b).astype(out_ref.dtype)


# ----------------------------------------------------------------------------
# Tile selection: aim for ~4 MiB sequence tiles (measured sweet spot for
# mem-bound kernels), constrained to a multiple-of-8 divisor of S so blocks
# tile the array exactly.  Fits comfortably in VMEM on v5e/v6e/v7x with
# double-buffered in+out (~16 MiB live) under the raised 48 MiB limit.
# ----------------------------------------------------------------------------
def _pick_seq_tile(S, E, itemsize, target_bytes=4 * 1024 * 1024):
    target_rows = max(8, target_bytes // max(1, E * itemsize))
    if S <= target_rows:
        return S
    best = 0
    t = 8
    while t <= target_rows:
        if S % t == 0:
            best = t
        t += 8
    # TODO(synk): for S with no multiple-of-8 divisor <= target, pad/mask the
    # ragged tail instead of falling back to one whole-sequence tile.
    return best if best > 0 else S


# ----------------------------------------------------------------------------
# Wrapper
# ----------------------------------------------------------------------------
def simple_cogvideox_layernorm_zero(hidden_states, temb, params, *, eps=1e-5,
                                    seq_tile=None):
    B, S, E = hidden_states.shape
    C = temb.shape[1]
    assert params["linear_w"].shape == (3 * E, C)

    w = params["linear_w"]                                    # [3E, C] (no .T)
    bias = params["linear_b"].reshape(1, 3 * E)
    gamma = params["ln_w"].reshape(1, E)
    beta = params["ln_b"].reshape(1, E)

    vmem_limit = 48 * 1024 * 1024   # safe on v7x (64 MiB phys), ample on v5e/v6e

    # --- temb path: silu + linear + modulation fold (single-block kernel) ---
    mod_a, mod_b, gate = pl.pallas_call(
        functools.partial(temb_linear_kernel, embedding_dim=E),
        out_shape=(
            jax.ShapeDtypeStruct((B, E), jnp.float32),        # A
            jax.ShapeDtypeStruct((B, E), jnp.float32),        # Bias
            jax.ShapeDtypeStruct((B, 1, E), jnp.float32),     # gate
        ),
        compiler_params=pltpu.CompilerParams(vmem_limit_bytes=vmem_limit),
    )(temb, w, bias, gamma, beta)

    # --- hidden path: LayerNorm + fused modulation, tiled over (batch, seq) ---
    if seq_tile is None:
        seq_tile = _pick_seq_tile(S, E, hidden_states.dtype.itemsize)
    assert S % seq_tile == 0

    grid = (B, S // seq_tile)
    out = pl.pallas_call(
        functools.partial(ln_mod_kernel, eps=eps),
        out_shape=jax.ShapeDtypeStruct((B, S, E), hidden_states.dtype),
        grid=grid,
        in_specs=[
            pl.BlockSpec((1, seq_tile, E), lambda b, s: (b, s, 0)),   # x
            pl.BlockSpec((1, E), lambda b, s: (b, 0)),                # A
            pl.BlockSpec((1, E), lambda b, s: (b, 0)),                # Bias
        ],
        out_specs=pl.BlockSpec((1, seq_tile, E), lambda b, s: (b, s, 0)),
        compiler_params=pltpu.CompilerParams(
            dimension_semantics=("parallel", "parallel"),
            vmem_limit_bytes=vmem_limit),
    )(hidden_states, mod_a, mod_b)

    return out, gate


# ----------------------------------------------------------------------------
# Pure-JAX reference (for sanity check)
# ----------------------------------------------------------------------------
def reference(hidden_states, temb, params, eps=1e-5):
    x = jax.nn.silu(temb)
    lin = x @ params["linear_w"].T + params["linear_b"]
    E = hidden_states.shape[-1]
    shift, scale, gate = jnp.split(lin, 3, axis=1)
    mean = jnp.mean(hidden_states, axis=-1, keepdims=True)
    var = jnp.mean(jnp.square(hidden_states - mean), axis=-1, keepdims=True)
    xn = (hidden_states - mean) * jax.lax.rsqrt(var + eps)
    xn = xn * params["ln_w"] + params["ln_b"]
    out = xn * (1.0 + scale)[:, None, :] + shift[:, None, :]
    return out, gate[:, None, :]


if __name__ == "__main__":
    # Small shapes consistent with the module's forward.
    B = 2            # batch
    S = 16           # sequence length
    E = 128          # embedding_dim
    C = 128          # conditioning_dim
    eps = 1e-5

    key = jax.random.PRNGKey(0)
    k1, k2, k3, k4 = jax.random.split(key, 4)

    hidden_states = jax.random.normal(k1, (B, S, E), dtype=jnp.float32)
    temb = jax.random.normal(k2, (B, C), dtype=jnp.float32)

    # Deterministic parameter init (shapes from nn.Linear / nn.LayerNorm).
    params = {
        "linear_w": 0.02 * jax.random.normal(k3, (3 * E, C), dtype=jnp.float32),
        "linear_b": 0.01 * jax.random.normal(k4, (3 * E,), dtype=jnp.float32),
        "ln_w": jnp.ones((E,), dtype=jnp.float32),      # LayerNorm weight
        "ln_b": jnp.zeros((E,), dtype=jnp.float32),     # LayerNorm bias
    }

    out, gate = simple_cogvideox_layernorm_zero(hidden_states, temb, params,
                                                eps=eps)
    out = jax.block_until_ready(out)
    gate = jax.block_until_ready(gate)

    ref_out, ref_gate = reference(hidden_states, temb, params, eps=eps)
    assert out.shape == (B, S, E) and gate.shape == (B, 1, E)
    assert jnp.allclose(out, ref_out, atol=1e-4, rtol=1e-4)
    assert jnp.allclose(gate, ref_gate, atol=1e-4, rtol=1e-4)

    print("KERNEL_OK")
</pallas_src>

<mosaic_0001>
module attributes {stable_mosaic.version = 11 : i64} {
  func.func @temb_linear_kernel(%arg0: memref<2x128xf32, #tpu.memory_space<vmem>>, %arg1: memref<384x128xf32, #tpu.memory_space<vmem>>, %arg2: memref<1x384xf32, #tpu.memory_space<vmem>>, %arg3: memref<1x128xf32, #tpu.memory_space<vmem>>, %arg4: memref<1x128xf32, #tpu.memory_space<vmem>>, %arg5: memref<2x128xf32, #tpu.memory_space<vmem>>, %arg6: memref<2x128xf32, #tpu.memory_space<vmem>>, %arg7: memref<2x1x128xf32, #tpu.memory_space<vmem>>) attributes {dimension_semantics = [], scalar_prefetch = 0 : i64, scratch_operands = 0 : i64, tpu.core_type = #tpu.core_type<tc>} {
    %c0 = arith.constant 0 : index
    %c0_0 = arith.constant 0 : index
    %0 = vector.load %arg0[%c0, %c0_0] : memref<2x128xf32, #tpu.memory_space<vmem>>, vector<2x128xf32>
    %1 = arith.negf %0 : vector<2x128xf32>
    %2 = math.exp %1 : vector<2x128xf32>
    %cst = arith.constant 1.000000e+00 : f32
    %3 = vector.broadcast %cst : f32 to vector<2x128xf32>
    %4 = arith.addf %3, %2 : vector<2x128xf32>
    %5 = arith.divf %3, %4 : vector<2x128xf32>
    %6 = arith.mulf %0, %5 : vector<2x128xf32>
    %c0_1 = arith.constant 0 : index
    %c0_2 = arith.constant 0 : index
    %7 = vector.load %arg1[%c0_1, %c0_2] : memref<384x128xf32, #tpu.memory_space<vmem>>, vector<384x128xf32>
    %cst_3 = arith.constant dense<0.000000e+00> : vector<2x384xf32>
    %8 = tpu.matmul %6, %7, %cst_3 {dimension_numbers = #tpu.dot_dimension_numbers<[1], [1], [0], [0], [0, 0, 1, 0], [], []>} : vector<2x128xf32>, vector<384x128xf32>, vector<2x384xf32> -> vector<2x384xf32>
    %c0_4 = arith.constant 0 : index
    %c0_5 = arith.constant 0 : index
    %9 = vector.load %arg2[%c0_4, %c0_5] : memref<1x384xf32, #tpu.memory_space<vmem>>, vector<1x384xf32>
    %10 = vector.broadcast %9 : vector<1x384xf32> to vector<2x384xf32>
    %11 = arith.addf %8, %10 : vector<2x384xf32>
    %12 = vector.extract_strided_slice %11 {offsets = [0, 0], sizes = [2, 128], strides = [1, 1]} : vector<2x384xf32> to vector<2x128xf32>
    %13 = vector.extract_strided_slice %11 {offsets = [0, 128], sizes = [2, 128], strides = [1, 1]} : vector<2x384xf32> to vector<2x128xf32>
    %14 = vector.extract_strided_slice %11 {offsets = [0, 256], sizes = [2, 128], strides = [1, 1]} : vector<2x384xf32> to vector<2x128xf32>
    %cst_6 = arith.constant 1.000000e+00 : f32
    %15 = vector.broadcast %cst_6 : f32 to vector<2x128xf32>
    %16 = arith.addf %15, %13 : vector<2x128xf32>
    %c0_7 = arith.constant 0 : index
    %c0_8 = arith.constant 0 : index
    %17 = vector.load %arg3[%c0_7, %c0_8] : memref<1x128xf32, #tpu.memory_space<vmem>>, vector<1x128xf32>
    %18 = vector.broadcast %17 : vector<1x128xf32> to vector<2x128xf32>
    %19 = arith.mulf %18, %16 : vector<2x128xf32>
    %c0_9 = arith.constant 0 : index
    %c0_10 = arith.constant 0 : index
    %20 = vector.load %arg5[%c0_9, %c0_10] : memref<2x128xf32, #tpu.memory_space<vmem>>, vector<2x128xf32>
    tpu.vector_store %arg5[%c0_9, %c0_10], %19 {strides = array<i32>} : memref<2x128xf32, #tpu.memory_space<vmem>>, vector<2x128xf32>,
    %c0_11 = arith.constant 0 : index
    %c0_12 = arith.constant 0 : index
    %21 = vector.load %arg4[%c0_11, %c0_12] : memref<1x128xf32, #tpu.memory_space<vmem>>, vector<1x128xf32>
    %22 = vector.broadcast %21 : vector<1x128xf32> to vector<2x128xf32>
    %23 = arith.mulf %22, %16 : vector<2x128xf32>
    %24 = arith.addf %23, %12 : vector<2x128xf32>
    %c0_13 = arith.constant 0 : index
    %c0_14 = arith.constant 0 : index
    %25 = vector.load %arg6[%c0_13, %c0_14] : memref<2x128xf32, #tpu.memory_space<vmem>>, vector<2x128xf32>
    tpu.vector_store %arg6[%c0_13, %c0_14], %24 {strides = array<i32>} : memref<2x128xf32, #tpu.memory_space<vmem>>, vector<2x128xf32>,
    %26 = vector.shape_cast %14 : vector<2x128xf32> to vector<2x1x128xf32>
    %c0_15 = arith.constant 0 : index
    %c0_16 = arith.constant 0 : index
    %c0_17 = arith.constant 0 : index
    %27 = vector.load %arg7[%c0_15, %c0_16, %c0_17] : memref<2x1x128xf32, #tpu.memory_space<vmem>>, vector<2x1x128xf32>
    tpu.vector_store %arg7[%c0_15, %c0_16, %c0_17], %26 {strides = array<i32>} : memref<2x1x128xf32, #tpu.memory_space<vmem>>, vector<2x1x128xf32>,
    return
  }
}

</mosaic_0001>

<llo_original>
// kernel: tpu_custom_call.1
$region0: #{tpu_custom_call.1}
  #allocation0 [shape = 'u32[]', space=smem, size = 0x4, offset = 0x4, fixed_abs, tag = 'smem constant byte address 0x4 - core index']
  #allocation1 [shape = 'u32[72,128]{1,0:T(1,128)}', space=vmem, size = 0x9000, scoped, tag = 'internal scratch']
  %s0 = inlined_call_operand.hbm [shape: f32[2,128], index: 0, kind: input, shape index: {}]
  %s1 = inlined_call_operand.hbm [shape: f32[384,128], index: 1, kind: input, shape index: {}]
  %s2 = inlined_call_operand.hbm [shape: f32[1,384], index: 2, kind: input, shape index: {}]
  %s3 = inlined_call_operand.vmem [shape: f32[1,128], index: 3, kind: input, shape index: {}]
  %s4 = inlined_call_operand.vmem [shape: f32[1,128], index: 4, kind: input, shape index: {}]
  %s5 = inlined_call_operand.hbm [shape: f32[2,128], index: 5, kind: output, shape index: {0}]
  %s6 = inlined_call_operand.hbm [shape: f32[2,128], index: 6, kind: output, shape index: {1}]
  %s7 = inlined_call_operand.hbm [shape: f32[2,1,128], index: 7, kind: output, shape index: {2}]
  %8 = xla_tuple %s5, %s6, %s7
  %s9 = sld [smem:[#allocation0]]
  $region58: #{tpu_custom_call.1} parent=0
    _
  %s11 = ssub.s32 1, %s9
  %s12 = scalar_select 0, %s11, %s9
  $region1: #{tpu_custom_call.1} parent=0
    #allocation2 [shape = 'u8[1024]{0}', space=vmem, size = 0x400, scoped, tag = 'input window, operand 0, single buffered']
    #allocation3 [shape = 's32[1]{0}', space=sflag, size = 0x4, scoped, tag = 'scoped memory for tpu_custom_call.1']
    #allocation4 [shape = 's32[1]{0}', space=sflag, size = 0x4, scoped, tag = 'scoped memory for tpu_custom_call.1']
    #allocation5 [shape = 'u8[196608]{0}', space=vmem, size = 0x30000, scoped, tag = 'input window, operand 1, single buffered']
    #allocation6 [shape = 's32[1]{0}', space=sflag, size = 0x4, scoped, tag = 'scoped memory for tpu_custom_call.1']
    #allocation7 [shape = 'u8[1536]{0}', space=vmem, size = 0x800, scoped, tag = 'input window, operand 2, single buffered']
    #allocation8 [shape = 'u8[1024]{0}', space=vmem, size = 0x400, scoped, tag = 'output window, operand 0, single buffered']
    #allocation9 [shape = 'u8[1024]{0}', space=vmem, size = 0x400, scoped, tag = 'output window, operand 1, single buffered']
    #allocation10 [shape = 's32[1]{0}', space=sflag, size = 0x4, scoped, tag = 'scoped memory for tpu_custom_call.1']
    #allocation11 [shape = 'u8[1024]{0}', space=vmem, size = 0x400, scoped, tag = 'output window, operand 2, single buffered']
    %13 = vsyncpa [#allocation3], 0
    %14 = vsyncpa [#allocation6], 0
    %15 = vsyncpa [#allocation4], 0
    %16 = vsyncpa [#allocation10], 0
    // Predicated region
    $region2: #{tpu_custom_call.1} parent=1 // pred_check
      _
    $region3: #{tpu_custom_call.1} parent=1 // pred_check_branch
      %18 = sbr.rel (0) target = $region5
    $region4: #{tpu_custom_call.1} parent=1 // pred_region
      %20 = vsyncadd [#allocation3], 0
      %s22 = sshll.u32 %s0, 4
      %s23 = int_to_ptr.hbm [resolvable:$true] %s22
      %s24 = sshll.u32 [#allocation2], 4
      %s25 = int_to_ptr.vmem [resolvable:$true] %s24
      %27 = dma.hbm_to_vmem [thread:$0]  %s23, 32, %s25, [#allocation3]
    $region5: #{tpu_custom_call.1} parent=1 // pred_fallthru
      _
    // Predicated region
    $region6: #{tpu_custom_call.1} parent=1 // pred_check
      _
    $region7: #{tpu_custom_call.1} parent=1 // pred_check_branch
      %29 = sbr.rel (0) target = $region9
    $region8: #{tpu_custom_call.1} parent=1 // pred_region
      %31 = vsyncadd [#allocation6], 0
      %s32 = sshll.u32 %s1, 4
      %s33 = int_to_ptr.hbm [resolvable:$true] %s32
      %s34 = sshll.u32 [#allocation5], 4
      %s35 = int_to_ptr.vmem [resolvable:$true] %s34
      %40 = dma.hbm_to_vmem [thread:$0]  %s33, 6144, %s35, [#allocation6], 128, 128, 8
    $region9: #{tpu_custom_call.1} parent=1 // pred_fallthru
      _
    // Predicated region
    $region10: #{tpu_custom_call.1} parent=1 // pred_check
      _
    $region11: #{tpu_custom_call.1} parent=1 // pred_check_branch
      %42 = sbr.rel (0) target = $region13
    $region12: #{tpu_custom_call.1} parent=1 // pred_region
      %44 = vsyncadd [#allocation6], 0
      %s46 = sshll.u32 %s2, 4
      %s47 = int_to_ptr.hbm [resolvable:$true] %s46
      %s48 = sshll.u32 [#allocation7], 4
      %s49 = int_to_ptr.vmem [resolvable:$true] %s48
      %51 = dma.hbm_to_vmem [thread:$0]  %s47, 48, %s49, [#allocation6]
    $region13: #{tpu_custom_call.1} parent=1 // pred_fallthru
      _
    // Predicated region
    $region14: #{tpu_custom_call.1} parent=1 // pred_check
      _
    $region15: #{tpu_custom_call.1} parent=1 // pred_check_branch
      %53 = sbr.rel (0) target = $region17
    $region16: #{tpu_custom_call.1} parent=1 // pred_region
      _
    $region17: #{tpu_custom_call.1} parent=1 // pred_fallthru
      _
    // Predicated region
    $region18: #{tpu_custom_call.1} parent=1 // pred_check
      _
    $region19: #{tpu_custom_call.1} parent=1 // pred_check_branch
      %55 = sbr.rel (0) target = $region21
    $region20: #{tpu_custom_call.1} parent=1 // pred_region
      _
    $region21: #{tpu_custom_call.1} parent=1 // pred_fallthru
      _
    // Predicated region
    $region22: #{tpu_custom_call.1} parent=1 // pred_check
      _
    $region23: #{tpu_custom_call.1} parent=1 // pred_check_branch
      %57 = sbr.rel (0) target = $region25
    $region24: #{tpu_custom_call.1} parent=1 // pred_region
      %59 = dma.done [#allocation3], 32
    $region25: #{tpu_custom_call.1} parent=1 // pred_fallthru
      _
    // Predicated region
    $region26: #{tpu_custom_call.1} parent=1 // pred_check
      _
    $region27: #{tpu_custom_call.1} parent=1 // pred_check_branch
      %61 = sbr.rel (0) target = $region29
    $region28: #{tpu_custom_call.1} parent=1 // pred_region
      %63 = dma.done [#allocation6], 6144
    $region29: #{tpu_custom_call.1} parent=1 // pred_fallthru
      _
    // Predicated region
    $region30: #{tpu_custom_call.1} parent=1 // pred_check
      _
    $region31: #{tpu_custom_call.1} parent=1 // pred_check_branch
      %65 = sbr.rel (0) target = $region33
    $region32: #{tpu_custom_call.1} parent=1 // pred_region
      %67 = dma.done [#allocation6], 48
    $region33: #{tpu_custom_call.1} parent=1 // pred_fallthru
      _
    %v68 = vld [vmem:[#allocation2] sm:$0x3]
    %v69 = vxor.u32 %v68, 2147483648
    %v70 = vmul.f32 %v69, 1.442695
    %v71 = vpow.pop %v70
    %v72 = vadd.f32 %v71, 1.0
    %v73 = vrcp.pop %v72
    %v74 = vmul.f32 %v72, %v73
    %v75 = vsub.f32 1.0, %v74
    %v76 = vmul.f32 %v73, %v75
    %v77 = vadd.f32 %v73, %v76
    %vm78 = vweird.f32 %v72
    %vm79 = vweird.f32 %v73
    %vm80 = vmor %vm78, %vm79
    %v81 = vsel %vm80, %v73, %v77
    %v82 = vand.u32 2147483647, %v72
    %vm83 = vcmp.eq.f32.partialorder %v82, 8.507059e+37
    %v84 = vand.u32 %v72, 2147483648
    %v85 = vor.u32 1.1754944e-38, %v84
    %v86 = vsel %vm83, %v85, %v81
    %v87 = vmul.f32 1.0, %v86
    %v88 = vmul.f32 %v68, %v87
    %v89 = vld [vmem:[#allocation5] sm:$0xff]
    %v90 = vld [vmem:[#allocation5 + $0x8] sm:$0xff]
    %v91 = vld [vmem:[#allocation5 + $0x10] sm:$0xff]
    %v92 = vld [vmem:[#allocation5 + $0x18] sm:$0xff]
    %v93 = vld [vmem:[#allocation5 + $0x20] sm:$0xff]
    %v94 = vld [vmem:[#allocation5 + $0x28] sm:$0xff]
    %v95 = vld [vmem:[#allocation5 + $0x30] sm:$0xff]
    %v96 = vld [vmem:[#allocation5 + $0x38] sm:$0xff]
    %v97 = vld [vmem:[#allocation5 + $0x40] sm:$0xff]
    %v98 = vld [vmem:[#allocation5 + $0x48] sm:$0xff]
    %v99 = vld [vmem:[#allocation5 + $0x50] sm:$0xff]
    %v100 = vld [vmem:[#allocation5 + $0x58] sm:$0xff]
    %v101 = vld [vmem:[#allocation5 + $0x60] sm:$0xff]
    %v102 = vld [vmem:[#allocation5 + $0x68] sm:$0xff]
    %v103 = vld [vmem:[#allocation5 + $0x70] sm:$0xff]
    %v104 = vld [vmem:[#allocation5 + $0x78] sm:$0xff]
    %v105 = vld [vmem:[#allocation5 + $0x80] sm:$0xff]
    %v106 = vld [vmem:[#allocation5 + $0x88] sm:$0xff]
    %v107 = vld [vmem:[#allocation5 + $0x90] sm:$0xff]
    %v108 = vld [vmem:[#allocation5 + $0x98] sm:$0xff]
    %v109 = vld [vmem:[#allocation5 + $0xa0] sm:$0xff]
    %v110 = vld [vmem:[#allocation5 + $0xa8] sm:$0xff]
    %v111 = vld [vmem:[#allocation5 + $0xb0] sm:$0xff]
    %v112 = vld [vmem:[#allocation5 + $0xb8] sm:$0xff]
    %v113 = vld [vmem:[#allocation5 + $0xc0] sm:$0xff]
    %v114 = vld [vmem:[#allocation5 + $0xc8] sm:$0xff]
    %v115 = vld [vmem:[#allocation5 + $0xd0] sm:$0xff]
    %v116 = vld [vmem:[#allocation5 + $0xd8] sm:$0xff]
    %v117 = vld [vmem:[#allocation5 + $0xe0] sm:$0xff]
    %v118 = vld [vmem:[#allocation5 + $0xe8] sm:$0xff]
    %v119 = vld [vmem:[#allocation5 + $0xf0] sm:$0xff]
    %v120 = vld [vmem:[#allocation5 + $0xf8] sm:$0xff]
    %v121 = vld [vmem:[#allocation5 + $0x100] sm:$0xff]
    %v122 = vld [vmem:[#allocation5 + $0x108] sm:$0xff]
    %v123 = vld [vmem:[#allocation5 + $0x110] sm:$0xff]
    %v124 = vld [vmem:[#allocation5 + $0x118] sm:$0xff]
    %v125 = vld [vmem:[#allocation5 + $0x120] sm:$0xff]
    %v126 = vld [vmem:[#allocation5 + $0x128] sm:$0xff]
    %v127 = vld [vmem:[#allocation5 + $0x130] sm:$0xff]
    %v128 = vld [vmem:[#allocation5 + $0x138] sm:$0xff]
    %v129 = vld [vmem:[#allocation5 + $0x140] sm:$0xff]
    %v130 = vld [vmem:[#allocation5 + $0x148] sm:$0xff]
    %v131 = vld [vmem:[#allocation5 + $0x150] sm:$0xff]
    %v132 = vld [vmem:[#allocation5 + $0x158] sm:$0xff]
    %v133 = vld [vmem:[#allocation5 + $0x160] sm:$0xff]
    %v134 = vld [vmem:[#allocation5 + $0x168] sm:$0xff]
    %v135 = vld [vmem:[#allocation5 + $0x170] sm:$0xff]
    %v136 = vld [vmem:[#allocation5 + $0x178] sm:$0xff]
    %v137 = vld [vmem:[#allocation7] sm:$0x7]
    %v139 = vperm.slane %v137, 0
    %v140 = vperm.slane %v137, 1
    %v141 = vperm.slane %v137, 2
    %145 = vmatpush.xpose.msra.mxu0 %v104
    %146 = vmatpush.xpose.msra.mxu0 %v103
    %147 = vmatpush.xpose.msra.mxu0 %v102
    %148 = vmatpush.xpose.msra.mxu0 %v101
    %149 = vmatpush.xpose.msra.mxu0 %v100
    %150 = vmatpush.xpose.msra.mxu0 %v99
    %151 = vmatpush.xpose.msra.mxu0 %v98
    %152 = vmatpush.xpose.msra.mxu0 %v97
    %153 = vmatpush.xpose.msra.mxu0 %v96
    %154 = vmatpush.xpose.msra.mxu0 %v95
    %155 = vmatpush.xpose.msra.mxu0 %v94
    %156 = vmatpush.xpose.msra.mxu0 %v93
    %157 = vmatpush.xpose.msra.mxu0 %v92
    %158 = vmatpush.xpose.msra.mxu0 %v91
    %159 = vmatpush.xpose.msra.mxu0 %v90
    %160 = vmatpush.xpose.msra.mxu0 %v89
    %161 = vmatmul.f32.gmra.mxu0 %v88
    %v162 = vpop.f32.mrf.mxu0
    %v163 = vadd.f32 %v139, %v162
    %164 = vdwg.mxu0
    %165 = vmatpush.xpose.msra.mxu0 %v120
    %166 = vmatpush.xpose.msra.mxu0 %v119
    %167 = vmatpush.xpose.msra.mxu0 %v118
    %168 = vmatpush.xpose.msra.mxu0 %v117
    %169 = vmatpush.xpose.msra.mxu0 %v116
    %170 = vmatpush.xpose.msra.mxu0 %v115
    %171 = vmatpush.xpose.msra.mxu0 %v114
    %172 = vmatpush.xpose.msra.mxu0 %v113
    %173 = vmatpush.xpose.msra.mxu0 %v112
    %174 = vmatpush.xpose.msra.mxu0 %v111
    %175 = vmatpush.xpose.msra.mxu0 %v110
    %176 = vmatpush.xpose.msra.mxu0 %v109
    %177 = vmatpush.xpose.msra.mxu0 %v108
    %178 = vmatpush.xpose.msra.mxu0 %v107
    %179 = vmatpush.xpose.msra.mxu0 %v106
    %180 = vmatpush.xpose.msra.mxu0 %v105
    %181 = vmatmul.f32.gmra.mxu0 %v88
    %v182 = vpop.f32.mrf.mxu0
    %v183 = vadd.f32 %v140, %v182
    %184 = vdwg.mxu0
    %185 = vmatpush.xpose.msra.mxu0 %v136
    %186 = vmatpush.xpose.msra.mxu0 %v135
    %187 = vmatpush.xpose.msra.mxu0 %v134
    %188 = vmatpush.xpose.msra.mxu0 %v133
    %189 = vmatpush.xpose.msra.mxu0 %v132
    %190 = vmatpush.xpose.msra.mxu0 %v131
    %191 = vmatpush.xpose.msra.mxu0 %v130
    %192 = vmatpush.xpose.msra.mxu0 %v129
    %193 = vmatpush.xpose.msra.mxu0 %v128
    %194 = vmatpush.xpose.msra.mxu0 %v127
    %195 = vmatpush.xpose.msra.mxu0 %v126
    %196 = vmatpush.xpose.msra.mxu0 %v125
    %197 = vmatpush.xpose.msra.mxu0 %v124
    %198 = vmatpush.xpose.msra.mxu0 %v123
    %199 = vmatpush.xpose.msra.mxu0 %v122
    %200 = vmatpush.xpose.msra.mxu0 %v121
    %201 = vmatmul.f32.gmra.mxu0 %v88
    %v202 = vpop.f32.mrf.mxu0
    %v203 = vadd.f32 %v141, %v202
    %204 = vdwg.mxu0
    %v205 = vadd.f32 %v183, 1.0
    %v206 = vld [vmem:[%s3] sm:$0x1]
    %v208 = vperm.slane %v206, 0
    %v210 = vmul.f32 %v208, %v205
    %211 = vst [vmem:[#allocation8] sm:$0x3] %v210
    %v212 = vld [vmem:[%s4] sm:$0x1]
    %v214 = vperm.slane %v212, 0
    %v216 = vmul.f32 %v214, %v205
    %v217 = vadd.f32 %v216, %v163
    %218 = vst [vmem:[#allocation9] sm:$0x3] %v217
    %v220 = vrot.slane %v203, 1
    %222 = vst [vmem:[#allocation11] sm:$0x1] %v203
    %223 = vst [vmem:[#allocation11 + $0x1] sm:$0x1] %v220
    // Predicated region
    $region34: #{tpu_custom_call.1} parent=1 // pred_check
      _
    $region35: #{tpu_custom_call.1} parent=1 // pred_check_branch
      %225 = sbr.rel (0) target = $region37
    $region36: #{tpu_custom_call.1} parent=1 // pred_region
      %227 = vsyncadd [#allocation4], 0
      %s229 = sshll.u32 [#allocation8], 4
      %s230 = int_to_ptr.vmem [resolvable:$true] %s229
      %s231 = sshll.u32 %s5, 4
      %s232 = int_to_ptr.hbm [resolvable:$true] %s231
      %234 = dma.vmem_to_hbm [thread:$0]  %s230, 32, %s232, [#allocation4]
    $region37: #{tpu_custom_call.1} parent=1 // pred_fallthru
      _
    // Predicated region
    $region38: #{tpu_custom_call.1} parent=1 // pred_check
      _
    $region39: #{tpu_custom_call.1} parent=1 // pred_check_branch
      %236 = sbr.rel (0) target = $region41
    $region40: #{tpu_custom_call.1} parent=1 // pred_region
      %238 = vsyncadd [#allocation10], 0
      %s240 = sshll.u32 [#allocation9], 4
      %s241 = int_to_ptr.vmem [resolvable:$true] %s240
      %s242 = sshll.u32 %s6, 4
      %s243 = int_to_ptr.hbm [resolvable:$true] %s242
      %245 = dma.vmem_to_hbm [thread:$0]  %s241, 32, %s243, [#allocation10]
    $region41: #{tpu_custom_call.1} parent=1 // pred_fallthru
      _
    // Predicated region
    $region42: #{tpu_custom_call.1} parent=1 // pred_check
      _
    $region43: #{tpu_custom_call.1} parent=1 // pred_check_branch
      %247 = sbr.rel (0) target = $region45
    $region44: #{tpu_custom_call.1} parent=1 // pred_region
      %249 = vsyncadd [#allocation10], 0
      %s250 = sshll.u32 [#allocation11], 4
      %s251 = int_to_ptr.vmem [resolvable:$true] %s250
      %s252 = sshll.u32 %s7, 4
      %s253 = int_to_ptr.hbm [resolvable:$true] %s252
      %258 = dma.vmem_to_hbm [thread:$0]  %s251, 32, %s253, [#allocation10], 16, 16, 1
    $region45: #{tpu_custom_call.1} parent=1 // pred_fallthru
      _
    // Predicated region
    $region46: #{tpu_custom_call.1} parent=1 // pred_check
      _
    $region47: #{tpu_custom_call.1} parent=1 // pred_check_branch
      %260 = sbr.rel (0) target = $region49
    $region48: #{tpu_custom_call.1} parent=1 // pred_region
      %262 = dma.done [#allocation4], 32
    $region49: #{tpu_custom_call.1} parent=1 // pred_fallthru
      _
    // Predicated region
    $region50: #{tpu_custom_call.1} parent=1 // pred_check
      _
    $region51: #{tpu_custom_call.1} parent=1 // pred_check_branch
      %264 = sbr.rel (0) target = $region53
    $region52: #{tpu_custom_call.1} parent=1 // pred_region
      %266 = dma.done [#allocation10], 32
    $region53: #{tpu_custom_call.1} parent=1 // pred_fallthru
      _
    // Predicated region
    $region54: #{tpu_custom_call.1} parent=1 // pred_check
      _
    $region55: #{tpu_custom_call.1} parent=1 // pred_check_branch
      %268 = sbr.rel (0) target = $region57
    $region56: #{tpu_custom_call.1} parent=1 // pred_region
      %270 = dma.done [#allocation10], 32
    $region57: #{tpu_custom_call.1} parent=1 // pred_fallthru
      _
    %271 = vsyncpa [#allocation3], 1
    %272 = vsyncpa [#allocation6], 1
    %273 = vsyncpa [#allocation4], 1
    %274 = vsyncpa [#allocation10], 1

</llo_original>
